<compile_context>
chip_gen: v7x
topology: tpu7x:2x2x1
jax: 0.10.0
libtpu: 0.0.40
codegen_flags: <defaults>
</compile_context>

<pallas_src>
import math

import jax
import jax.numpy as jnp
from jax.experimental import pallas as pl
from jax.experimental.pallas import tpu as pltpu


_VMEM_LIMIT_BYTES = 48 * 1024 * 1024      # safe on v5e/v6e (128 MiB) and v7x (64 MiB)
_RESIDENT_BUDGET = 40 * 1024 * 1024       # gate for the weight-resident GEMM path
_ATTN_BUDGET = 36 * 1024 * 1024           # gate for the attention block budget


# ---------------------------------------------------------------------------
# Tile helpers — always (8, 128) aligned or full-dimension
# ---------------------------------------------------------------------------

def _sublane_tile(dim, target):
    if dim <= target:
        return dim
    return max((target // 8) * 8, 8)


def _lane_tile(dim, target):
    if dim <= target:
        return dim
    return max((target // 128) * 128, 128)


def _reduction_tile(dim, target):
    """Reduction (K) tile: must exactly divide dim and be a multiple of 128,
    otherwise fall back to the full dimension (no ragged reduction blocks)."""
    t = (min(target, dim) // 128) * 128
    while t >= 128:
        if dim % t == 0:
            return t
        t -= 128
    return dim


def _pick_heads_per_block(n_heads, d_kv, width_target=256):
    """Largest divisor hb of n_heads with hb*d_kv a multiple of 128 and <= target.
    Returns None if no such divisor exists (tiny/odd head dims)."""
    best = None
    for hb in range(1, n_heads + 1):
        if n_heads % hb:
            continue
        bw = hb * d_kv
        if bw % 128 == 0 and bw <= width_target:
            best = hb
    return best


# ---------------------------------------------------------------------------
# Kernel 1: Linear projection  y = x @ W^T  (nn.Linear, bias=False)
# ---------------------------------------------------------------------------

def _linear_resident_kernel(x_ref, w_ref, o_ref):
    # Weight stays resident in VMEM (constant index_map); single MXU matmul,
    # f32 accumulation, no scratch accumulator.
    o_ref[...] = jax.lax.dot_general(
        x_ref[...], w_ref[...],
        dimension_numbers=(((1,), (1,)), ((), ())),
        preferred_element_type=jnp.float32,
    ).astype(o_ref.dtype)


def _linear_acc_kernel(x_ref, w_ref, o_ref, acc_ref):
    @pl.when(pl.program_id(2) == 0)
    def _():
        acc_ref[...] = jnp.zeros_like(acc_ref)

    acc_ref[...] += jax.lax.dot_general(
        x_ref[...], w_ref[...],
        dimension_numbers=(((1,), (1,)), ((), ())),
        preferred_element_type=jnp.float32,
    )

    @pl.when(pl.program_id(2) == pl.num_programs(2) - 1)
    def _():
        o_ref[...] = acc_ref[...].astype(o_ref.dtype)


def linear_nobias(x2d, w, *, tm_target=512, tn_target=512, tk_target=1024):
    """x2d: (M, K), w: (N, K)  [PyTorch nn.Linear layout]  ->  (M, N)."""
    M, K = x2d.shape
    N, K2 = w.shape
    assert K == K2, (K, K2)
    itemsize = jnp.dtype(x2d.dtype).itemsize

    tm = _sublane_tile(M, tm_target)
    grid_m = pl.cdiv(M, tm)

    # --- Weight-resident path (typical T5 sizes) --------------------------------
    w_bytes = N * K * jnp.dtype(w.dtype).itemsize
    resident_bytes = (2 * w_bytes                 # (double-buffered) weight window
                      + 2 * tm * K * itemsize     # x tiles
                      + 2 * tm * N * itemsize     # out tiles
                      + tm * N * 4)               # f32 matmul result temp
    if resident_bytes <= _RESIDENT_BUDGET:
        return pl.pallas_call(
            _linear_resident_kernel,
            out_shape=jax.ShapeDtypeStruct((M, N), x2d.dtype),
            grid_spec=pltpu.PrefetchScalarGridSpec(
                num_scalar_prefetch=0,
                grid=(grid_m,),
                in_specs=[
                    pl.BlockSpec((tm, K), lambda i: (i, 0)),
                    pl.BlockSpec((N, K), lambda i: (0, 0)),   # constant -> resident
                ],
                out_specs=pl.BlockSpec((tm, N), lambda i: (i, 0)),
            ),
            compiler_params=pltpu.CompilerParams(
                dimension_semantics=("parallel",),
                vmem_limit_bytes=_VMEM_LIMIT_BYTES,
            ),
        )(x2d, w)

    # --- Fallback: K-tiled reduction with f32 VMEM accumulator ------------------
    tn = _lane_tile(N, tn_target)
    tk = _reduction_tile(K, tk_target)
    grid = (grid_m, pl.cdiv(N, tn), K // tk)

    return pl.pallas_call(
        _linear_acc_kernel,
        out_shape=jax.ShapeDtypeStruct((M, N), x2d.dtype),
        grid_spec=pltpu.PrefetchScalarGridSpec(
            num_scalar_prefetch=0,
            grid=grid,
            in_specs=[
                pl.BlockSpec((tm, tk), lambda i, j, k: (i, k)),
                pl.BlockSpec((tn, tk), lambda i, j, k: (j, k)),
            ],
            out_specs=pl.BlockSpec((tm, tn), lambda i, j, k: (i, j)),
            scratch_shapes=[pltpu.VMEM((tm, tn), jnp.float32)],
        ),
        compiler_params=pltpu.CompilerParams(
            dimension_semantics=("parallel", "parallel", "arbitrary"),
            vmem_limit_bytes=_VMEM_LIMIT_BYTES,
        ),
    )(x2d, w)


# ---------------------------------------------------------------------------
# Kernel 2: fused attention core
#   scores = q @ k^T + bias ; softmax(f32) ; ctx = weights @ v
#   (T5 does NOT scale by 1/sqrt(d_kv).)
#   Blocks: hb heads x tq query rows per grid step, heads indexed straight out
#   of the fused projection slab; context written lane-dense into (bs, L, inner).
# ---------------------------------------------------------------------------

def _make_attention_kernel(hb, d_kv):
    def kernel(q_ref, k_ref, v_ref, b_ref, o_ref):
        q_all = q_ref[...]          # (tq, hb*d_kv)  native dtype -> MXU bf16-friendly
        k_all = k_ref[...]          # (klen, hb*d_kv)
        v_all = v_ref[...]          # (klen, hb*d_kv)
        ctx_parts = []
        for h in range(hb):
            sl = slice(h * d_kv, (h + 1) * d_kv)
            # scores = q_h @ k_h^T   (f32 accumulation on the MXU, operands not upcast)
            scores = jax.lax.dot_general(
                q_all[:, sl], k_all[:, sl],
                dimension_numbers=(((1,), (1,)), ((), ())),
                preferred_element_type=jnp.float32,
            )
            scores = scores + b_ref[h].astype(jnp.float32)
            m = jnp.max(scores, axis=-1, keepdims=True)
            e = jnp.exp(scores - m)
            denom = jnp.sum(e, axis=-1, keepdims=True)
            # divide -> EUP reciprocal (frees the VALU slot)
            weights = (e * pl.reciprocal(denom, approx=True)).astype(v_all.dtype)
            ctx_parts.append(
                jnp.dot(weights, v_all[:, sl], preferred_element_type=jnp.float32))
        ctx = ctx_parts[0] if hb == 1 else jnp.concatenate(ctx_parts, axis=-1)
        o_ref[...] = ctx.astype(o_ref.dtype)    # single full-width (lane-dense) store
    return kernel


def attention_core(q_arr, k_arr, v_arr, bias, *, n_heads, d_kv, hb,
                   q_col_off, k_col_off, v_col_off, out_dtype,
                   tq_target=256):
    """q_arr: (bs, qlen, Wq), k_arr/v_arr: (bs, klen, Wkv) — head h of q lives at
    columns q_col_off + h*d_kv (analogously k/v; the arrays may be the same slab).
    bias: (1 or bs, n_heads, qlen, klen), f32.  Returns (bs, qlen, n_heads*d_kv)."""
    bs, qlen, _ = q_arr.shape
    klen = k_arr.shape[1]
    bw = hb * d_kv
    n_hb = n_heads // hb
    itemsize = jnp.dtype(q_arr.dtype).itemsize

    tq = qlen if qlen <= tq_target else (tq_target // 8) * 8

    def _est_bytes(tq_):
        bias_bytes = 2 * hb * tq_ * klen * 4              # double-buffered bias block
        score_tmp = 3 * hb * tq_ * klen * 4               # scores / exp / weights temps
        qkv_bytes = 2 * (tq_ + 2 * klen) * bw * itemsize  # q/k/v windows
        out_bytes = 2 * tq_ * bw * itemsize + tq_ * bw * 4
        return bias_bytes + score_tmp + qkv_bytes + out_bytes

    while tq > 8 and _est_bytes(tq) > _ATTN_BUDGET:
        tq = max(8, (tq // 2 // 8) * 8)
    # TODO(synk): flash-style Kl tiling for very long klen (v7x 64 MiB VMEM).

    grid = (n_hb, pl.cdiv(qlen, tq), bs)     # batch innermost -> bias block resident

    q_blk = q_col_off // bw
    k_blk = k_col_off // bw
    v_blk = v_col_off // bw
    bias_b = (lambda b: 0) if bias.shape[0] == 1 else (lambda b: b)

    return pl.pallas_call(
        _make_attention_kernel(hb, d_kv),
        out_shape=jax.ShapeDtypeStruct((bs, qlen, n_heads * d_kv), out_dtype),
        grid_spec=pltpu.PrefetchScalarGridSpec(
            num_scalar_prefetch=0,
            grid=grid,
            in_specs=[
                pl.BlockSpec((None, tq, bw), lambda hi, qi, b: (b, qi, q_blk + hi)),
                pl.BlockSpec((None, klen, bw), lambda hi, qi, b: (b, 0, k_blk + hi)),
                pl.BlockSpec((None, klen, bw), lambda hi, qi, b: (b, 0, v_blk + hi)),
                pl.BlockSpec((None, hb, tq, klen),
                             lambda hi, qi, b: (bias_b(b), hi, qi, 0)),
            ],
            out_specs=pl.BlockSpec((None, tq, bw), lambda hi, qi, b: (b, qi, hi)),
        ),
        compiler_params=pltpu.CompilerParams(
            dimension_semantics=("parallel", "parallel", "arbitrary"),
            vmem_limit_bytes=_VMEM_LIMIT_BYTES,
        ),
    )(q_arr, k_arr, v_arr, bias)


# ---------------------------------------------------------------------------
# Relative position bias (plain JAX: tiny data-dependent gather)
# ---------------------------------------------------------------------------

def _relative_position_bucket(relative_position, bidirectional=True,
                              num_buckets=32, max_distance=128):
    ret = jnp.zeros_like(relative_position)
    n = -relative_position
    if bidirectional:
        num_buckets //= 2
        ret = ret + (n < 0).astype(jnp.int32) * num_buckets
        n = jnp.abs(n)
    else:
        n = jnp.maximum(n, 0)
    max_exact = num_buckets // 2
    is_small = n < max_exact
    val_if_large = max_exact + (
        jnp.log(n.astype(jnp.float32) / max_exact)
        / math.log(max_distance / max_exact)
        * (num_buckets - max_exact)
    ).astype(jnp.int32)
    val_if_large = jnp.minimum(val_if_large, num_buckets - 1)
    ret = ret + jnp.where(is_small, n, val_if_large)
    return ret


def compute_bias(rel_emb, qlen, klen, *, num_buckets, bidirectional):
    """rel_emb: (num_buckets, n_heads) -> (1, n_heads, qlen, klen)."""
    context_position = jnp.arange(qlen, dtype=jnp.int32)[:, None]
    memory_position = jnp.arange(klen, dtype=jnp.int32)[None, :]
    relative_position = memory_position - context_position
    rp_bucket = _relative_position_bucket(
        relative_position, bidirectional=bidirectional, num_buckets=num_buckets)
    values = rel_emb[rp_bucket]                       # (qlen, klen, n_heads)
    values = jnp.transpose(values, (2, 0, 1))[None]   # (1, n_heads, qlen, klen)
    return values


# ---------------------------------------------------------------------------
# Full T5Attention forward
# ---------------------------------------------------------------------------

def t5_attention(x, wq, wk, wv, wo, *, n_heads, d_kv,
                 rel_emb=None, mask=None, kv=None, position_bias=None,
                 is_decoder=False, relative_attention_num_buckets=32):
    """
    x:  (bs, qlen, d_model)
    wq, wk, wv: (inner_dim, d_model)    wo: (d_model, inner_dim)   [PyTorch layout]
    rel_emb: (num_buckets, n_heads) or None
    Returns (context, position_bias)  (has_relative_attention_bias=True behaviour).
    """
    bs, qlen, d_model = x.shape
    inner = n_heads * d_kv
    x2d = x.reshape(bs * qlen, d_model)

    hb = _pick_heads_per_block(n_heads, d_kv)
    use_slab = hb is not None
    if not use_slab:
        hb = n_heads     # full-width head block; q/k/v split into separate arrays

    if kv is None:
        klen = qlen
        # Fused QKV projection: one activation pass, weight resident in VMEM.
        w_qkv = jnp.concatenate([wq, wk, wv], axis=0)           # (3*inner, d_model)
        qkv2d = linear_nobias(x2d, w_qkv)                       # (bs*qlen, 3*inner)
        if use_slab:
            slab = qkv2d.reshape(bs, qlen, 3 * inner)
            q_arr = k_arr = v_arr = slab
            q_off, k_off, v_off = 0, inner, 2 * inner
        else:
            q_arr = qkv2d[:, :inner].reshape(bs, qlen, inner)
            k_arr = qkv2d[:, inner:2 * inner].reshape(bs, qlen, inner)
            v_arr = qkv2d[:, 2 * inner:].reshape(bs, qlen, inner)
            q_off = k_off = v_off = 0
    else:
        klen = kv.shape[1]
        kv2d = kv.reshape(bs * klen, kv.shape[-1])
        w_kv = jnp.concatenate([wk, wv], axis=0)                # (2*inner, d_model)
        q_arr = linear_nobias(x2d, wq).reshape(bs, qlen, inner)
        kv_proj = linear_nobias(kv2d, w_kv)                     # (bs*klen, 2*inner)
        q_off = 0
        if use_slab:
            kv_slab = kv_proj.reshape(bs, klen, 2 * inner)
            k_arr = v_arr = kv_slab
            k_off, v_off = 0, inner
        else:
            k_arr = kv_proj[:, :inner].reshape(bs, klen, inner)
            v_arr = kv_proj[:, inner:].reshape(bs, klen, inner)
            k_off = v_off = 0

    if position_bias is None:
        if rel_emb is None:
            raise ValueError(
                "No position_bias provided and no weights to compute position_bias")
        position_bias = compute_bias(
            rel_emb, qlen, klen,
            num_buckets=relative_attention_num_buckets,
            bidirectional=not is_decoder)
        if mask is not None:
            position_bias = position_bias + mask

    # Transport the bias (which may carry the additive mask) in f32; the add and
    # softmax inside the kernel are f32 as well.
    bias_f32 = position_bias.astype(jnp.float32)

    ctx = attention_core(q_arr, k_arr, v_arr, bias_f32,
                         n_heads=n_heads, d_kv=d_kv, hb=hb,
                         q_col_off=q_off, k_col_off=k_off, v_col_off=v_off,
                         out_dtype=x.dtype)                     # (bs, qlen, inner)

    out = linear_nobias(ctx.reshape(bs * qlen, inner), wo).reshape(bs, qlen, d_model)
    return out, position_bias


# ---------------------------------------------------------------------------
# Pure-JAX reference (mirrors the PyTorch forward)
# ---------------------------------------------------------------------------

def _reference(x, wq, wk, wv, wo, rel_emb, *, n_heads, d_kv,
               num_buckets, is_decoder):
    bs, qlen, d_model = x.shape
    inner_dim = n_heads * d_kv

    def shape4(y):
        return y.reshape(bs, qlen, n_heads, d_kv).transpose(0, 2, 1, 3)

    q = shape4(x @ wq.T)
    k = shape4(x @ wk.T)
    v = shape4(x @ wv.T)
    scores = jnp.einsum("bhqd,bhkd->bhqk", q, k)
    bias = compute_bias(rel_emb, qlen, qlen,
                        num_buckets=num_buckets, bidirectional=not is_decoder)
    scores = scores + bias
    weights = jax.nn.softmax(scores.astype(jnp.float32), axis=-1).astype(scores.dtype)
    ctx = jnp.einsum("bhqk,bhkd->bhqd", weights, v)
    ctx = ctx.transpose(0, 2, 1, 3).reshape(bs, qlen, inner_dim)
    out = ctx @ wo.T
    return out, bias


# ---------------------------------------------------------------------------
# Smoke test
# ---------------------------------------------------------------------------

if __name__ == "__main__":
    key = jax.random.PRNGKey(0)
    batch, seq, d_model = 2, 8, 32
    n_heads, d_kv = 4, 8
    num_buckets = 32
    inner_dim = n_heads * d_kv

    keys = jax.random.split(key, 6)
    scale = 0.05
    x = jax.random.normal(keys[0], (batch, seq, d_model), dtype=jnp.float32)
    wq = jax.random.normal(keys[1], (inner_dim, d_model), dtype=jnp.float32) * scale
    wk = jax.random.normal(keys[2], (inner_dim, d_model), dtype=jnp.float32) * scale
    wv = jax.random.normal(keys[3], (inner_dim, d_model), dtype=jnp.float32) * scale
    wo = jax.random.normal(keys[4], (d_model, inner_dim), dtype=jnp.float32) * scale
    rel_emb = jax.random.normal(keys[5], (num_buckets, n_heads), dtype=jnp.float32) * scale

    out, pos_bias = t5_attention(
        x, wq, wk, wv, wo,
        n_heads=n_heads, d_kv=d_kv, rel_emb=rel_emb,
        is_decoder=False, relative_attention_num_buckets=num_buckets)
    out = jax.block_until_ready(out)
    pos_bias = jax.block_until_ready(pos_bias)

    ref_out, ref_bias = _reference(
        x, wq, wk, wv, wo, rel_emb,
        n_heads=n_heads, d_kv=d_kv, num_buckets=num_buckets, is_decoder=False)

    assert out.shape == (batch, seq, d_model) and out.dtype == x.dtype
    assert pos_bias.shape == (1, n_heads, seq, seq)
    assert jnp.allclose(pos_bias, ref_bias, atol=1e-5, rtol=1e-5)
    assert jnp.allclose(out, ref_out, atol=2e-3, rtol=2e-3), (
        float(jnp.max(jnp.abs(out - ref_out))))
    print("KERNEL_OK")
</pallas_src>

<mosaic_0001>
module attributes {stable_mosaic.version = 11 : i64} {
  func.func @_linear_resident_kernel(%arg0: i32, %arg1: memref<16x32xf32, #tpu.memory_space<vmem>>, %arg2: memref<96x32xf32, #tpu.memory_space<vmem>>, %arg3: memref<16x96xf32, #tpu.memory_space<vmem>>) attributes {dimension_semantics = [#tpu.dimension_semantics<parallel>], iteration_bounds = array<i64: 1>, scalar_prefetch = 0 : i64, scratch_operands = 0 : i64, tpu.core_type = #tpu.core_type<tc>, window_params = [{transform_indices = @transform_0, window_bounds = array<i64: 16, 32>}, {pipeline_mode = #tpu.pipeline_mode<synchronous>, transform_indices = @transform_1, window_bounds = array<i64: 96, 32>}, {transform_indices = @transform_2, window_bounds = array<i64: 16, 96>}]} {
    %c0 = arith.constant 0 : index
    %c0_0 = arith.constant 0 : index
    %0 = vector.load %arg1[%c0, %c0_0] : memref<16x32xf32, #tpu.memory_space<vmem>>, vector<16x32xf32>
    %c0_1 = arith.constant 0 : index
    %c0_2 = arith.constant 0 : index
    %1 = vector.load %arg2[%c0_1, %c0_2] : memref<96x32xf32, #tpu.memory_space<vmem>>, vector<96x32xf32>
    %cst = arith.constant dense<0.000000e+00> : vector<16x96xf32>
    %2 = tpu.matmul %0, %1, %cst {dimension_numbers = #tpu.dot_dimension_numbers<[1], [1], [0], [0], [0, 0, 1, 0], [], []>} : vector<16x32xf32>, vector<96x32xf32>, vector<16x96xf32> -> vector<16x96xf32>
    %c0_3 = arith.constant 0 : index
    %c0_4 = arith.constant 0 : index
    %3 = vector.load %arg3[%c0_3, %c0_4] : memref<16x96xf32, #tpu.memory_space<vmem>>, vector<16x96xf32>
    tpu.vector_store %arg3[%c0_3, %c0_4], %2 {strides = array<i32>} : memref<16x96xf32, #tpu.memory_space<vmem>>, vector<16x96xf32>,
    return
  }
  func.func @transform_0(%arg0: i32) -> (i32, i32) {
    %c0_i32 = arith.constant 0 : i32
    %c0_i32_0 = arith.constant 0 : i32
    return %arg0, %c0_i32 : i32, i32
  }
  func.func @transform_1(%arg0: i32) -> (i32, i32) {
    %c0_i32 = arith.constant 0 : i32
    %c0_i32_0 = arith.constant 0 : i32
    %c0_i32_1 = arith.constant 0 : i32
    return %c0_i32, %c0_i32_0 : i32, i32
  }
  func.func @transform_2(%arg0: i32) -> (i32, i32) {
    %c0_i32 = arith.constant 0 : i32
    %c0_i32_0 = arith.constant 0 : i32
    return %arg0, %c0_i32 : i32, i32
  }
}

</mosaic_0001>

<llo_original>
// kernel: tpu_custom_call.1
$region0: #{tpu_custom_call.1}
  #allocation0 [shape = 'u32[]', space=smem, size = 0x4, offset = 0x4, fixed_abs, tag = 'smem constant byte address 0x4 - core index']
  #allocation1 [shape = 'u32[144,128]{1,0:T(1,128)}', space=vmem, size = 0x12000, scoped, tag = 'internal scratch']
  %s0 = inlined_call_operand.vmem [shape: f32[16,32], index: 0, kind: input, shape index: {}]
  %s1 = inlined_call_operand.vmem [shape: f32[96,32], index: 1, kind: input, shape index: {}]
  %s2 = inlined_call_operand.hbm [shape: f32[16,96], index: 2, kind: output, shape index: {}]
  %s3 = sld [smem:[#allocation0]]
  $region18: #{tpu_custom_call.1} parent=0
    _
  %s5 = ssub.s32 1, %s3
  %s6 = scalar_select 0, %s5, %s3
  $region1: #{tpu_custom_call.1} parent=0
    #allocation2 [shape = 'u8[8192]{0}', space=vmem, size = 0x2000, scoped, tag = 'output window, operand 0, single buffered']
    #allocation3 [shape = 's32[1]{0}', space=sflag, size = 0x4, scoped, tag = 'scoped memory for tpu_custom_call.1']
    %7 = vsyncpa [#allocation3], 0
    // Predicated region
    $region2: #{tpu_custom_call.1} parent=1 // pred_check
      _
    $region3: #{tpu_custom_call.1} parent=1 // pred_check_branch
      %9 = sbr.rel (0) target = $region5
    $region4: #{tpu_custom_call.1} parent=1 // pred_region
      _
    $region5: #{tpu_custom_call.1} parent=1 // pred_fallthru
      _
    // Predicated region
    $region6: #{tpu_custom_call.1} parent=1 // pred_check
      _
    $region7: #{tpu_custom_call.1} parent=1 // pred_check_branch
      %11 = sbr.rel (0) target = $region9
    $region8: #{tpu_custom_call.1} parent=1 // pred_region
      _
    $region9: #{tpu_custom_call.1} parent=1 // pred_fallthru
      _
    %v12 = vld [vmem:[%s0] sm:$0xff]
    %v13 = vld [vmem:[%s0 + $0x8] sm:$0xff]
    %v14 = vld [vmem:[%s1] sm:$0xff]
    %v15 = vld [vmem:[%s1 + $0x8] sm:$0xff]
    %v16 = vld [vmem:[%s1 + $0x10] sm:$0xff]
    %v17 = vld [vmem:[%s1 + $0x18] sm:$0xff]
    %v18 = vld [vmem:[%s1 + $0x20] sm:$0xff]
    %v19 = vld [vmem:[%s1 + $0x28] sm:$0xff]
    %v20 = vld [vmem:[%s1 + $0x30] sm:$0xff]
    %v21 = vld [vmem:[%s1 + $0x38] sm:$0xff]
    %v22 = vld [vmem:[%s1 + $0x40] sm:$0xff]
    %v23 = vld [vmem:[%s1 + $0x48] sm:$0xff]
    %v24 = vld [vmem:[%s1 + $0x50] sm:$0xff]
    %v25 = vld [vmem:[%s1 + $0x58] sm:$0xff]
    %vm26 = vcmask 261120
    %v28 = vsel %vm26, %v12, 0
    %v31 = vsel %vm26, %v13, 0
    %v34 = vsel %vm26, %v14, 0
    %v37 = vsel %vm26, %v15, 0
    %v40 = vsel %vm26, %v16, 0
    %v43 = vsel %vm26, %v17, 0
    %v46 = vsel %vm26, %v18, 0
    %v49 = vsel %vm26, %v19, 0
    %v52 = vsel %vm26, %v20, 0
    %v55 = vsel %vm26, %v21, 0
    %v58 = vsel %vm26, %v22, 0
    %v61 = vsel %vm26, %v23, 0
    %v64 = vsel %vm26, %v24, 0
    %v67 = vsel %vm26, %v25, 0
    %69 = vmatprep.subr.mxu0 0.0
    %70 = vmatpush1.xpose.msra.mxu0 %v34
    %71 = vmatprep.subr.mxu0 0.0
    %72 = vmatpush1.xpose.msra.mxu0 %v37
    %73 = vmatprep.subr.mxu0 0.0
    %74 = vmatpush1.xpose.msra.mxu0 %v40
    %75 = vmatprep.subr.mxu0 0.0
    %76 = vmatpush1.xpose.msra.mxu0 %v43
    %77 = vmatprep.subr.mxu0 0.0
    %78 = vmatpush1.xpose.msra.mxu0 %v46
    %79 = vmatprep.subr.mxu0 0.0
    %80 = vmatpush1.xpose.msra.mxu0 %v49
    %81 = vmatprep.subr.mxu0 0.0
    %82 = vmatpush1.xpose.msra.mxu0 %v52
    %83 = vmatprep.subr.mxu0 0.0
    %84 = vmatpush1.xpose.msra.mxu0 %v55
    %85 = vmatprep.subr.mxu0 0.0
    %86 = vmatpush1.xpose.msra.mxu0 %v58
    %87 = vmatprep.subr.mxu0 0.0
    %88 = vmatpush1.xpose.msra.mxu0 %v61
    %89 = vmatprep.subr.mxu0 0.0
    %90 = vmatpush1.xpose.msra.mxu0 %v64
    %91 = vmatprep.subr.mxu0 0.0
    %92 = vmatpush1.xpose.msra.mxu0 %v67
    %93 = vmatprep.subr.mxu0 0.0
    %94 = vmatpush1.xpose.msra.mxu0 0.0
    %95 = vmatprep.subr.mxu0 0.0
    %96 = vmatpush1.xpose.msra.mxu0 0.0
    %97 = vmatprep.subr.mxu0 0.0
    %98 = vmatpush1.xpose.msra.mxu0 0.0
    %99 = vmatprep.subr.mxu0 0.0
    %100 = vmatpush1.xpose.msra.mxu0 0.0
    %101 = vmatprep.subr.mxu0 0.0
    %102 = vmatpush1.xpose.msra.mxu0 0.0
    %103 = vmatprep.subr.mxu0 0.0
    %104 = vmatpush1.xpose.msra.mxu0 0.0
    %105 = vmatprep.subr.mxu0 0.0
    %106 = vmatpush1.xpose.msra.mxu0 0.0
    %107 = vmatprep.subr.mxu0 0.0
    %108 = vmatpush1.xpose.msra.mxu0 0.0
    %109 = vmatprep.subr.mxu0 0.0
    %110 = vmatpush1.xpose.msra.mxu0 0.0
    %111 = vmatprep.subr.mxu0 0.0
    %112 = vmatpush1.xpose.msra.mxu0 0.0
    %113 = vmatprep.subr.mxu0 0.0
    %114 = vmatpush1.xpose.msra.mxu0 0.0
    %115 = vmatprep.subr.mxu0 0.0
    %116 = vmatpush1.xpose.msra.mxu0 0.0
    %117 = vmatprep.subr.mxu0 0.0
    %118 = vmatpush1.xpose.msra.mxu0 0.0
    %119 = vmatprep.subr.mxu0 0.0
    %120 = vmatpush1.xpose.msra.mxu0 0.0
    %121 = vmatprep.subr.mxu0 0.0
    %122 = vmatpush1.xpose.msra.mxu0 0.0
    %123 = vmatprep.subr.mxu0 0.0
    %124 = vmatpush1.xpose.msra.mxu0 0.0
    %125 = vmatprep.subr.mxu0 0.0
    %126 = vmatpush1.xpose.msra.mxu0 0.0
    %127 = vmatprep.subr.mxu0 0.0
    %128 = vmatpush1.xpose.msra.mxu0 0.0
    %129 = vmatprep.subr.mxu0 0.0
    %130 = vmatpush1.xpose.msra.mxu0 0.0
    %131 = vmatprep.subr.mxu0 0.0
    %132 = vmatpush1.xpose.msra.mxu0 0.0
    %133 = vmatprep.mubr.f32.mxu0 0.0
    %134 = vmatmul.mubr.f32.gmra.mrb[0].mxu0 %v28
    %v135 = vpop.f32.mrb[0].mxu0
    %v136 = vadd.f32 0.0, %v135
    %v137 = vpop.f32.mrb[0].mxu0
    %138 = vmatprep.mubr.f32.mxu0 0.0
    %139 = vmatmul.mubr.f32.gmra.mrb[0].mxu0 %v31
    %v140 = vpop.f32.mrb[0].mxu0
    %v141 = vadd.f32 0.0, %v140
    %v142 = vpop.f32.mrb[0].mxu0
    %143 = vdwg.mxu0
    %vm144 = vcmask 785408
    %145 = vst.msk [vmem:[#allocation2] sm:$0xff] %vm144, %v136
    %146 = vst.msk [vmem:[#allocation2 + $0x8] sm:$0xff] %vm144, %v141
    // Predicated region
    $region10: #{tpu_custom_call.1} parent=1 // pred_check
      _
    $region11: #{tpu_custom_call.1} parent=1 // pred_check_branch
      %148 = sbr.rel (0) target = $region13
    $region12: #{tpu_custom_call.1} parent=1 // pred_region
      %s150 = ssub.s32 256, 256
      %151 = vsyncadd [#allocation3], %s150
      %s152 = sshll.u32 [#allocation2], 4
      %s153 = int_to_ptr.vmem [resolvable:$true] %s152
      %158 = dma.vmem_to_hbm [thread:$0]  %s153, 256, %s2, [#allocation3], 128, 128, 8
    $region13: #{tpu_custom_call.1} parent=1 // pred_fallthru
      _
    // Predicated region
    $region14: #{tpu_custom_call.1} parent=1 // pred_check
      _
    $region15: #{tpu_custom_call.1} parent=1 // pred_check_branch
      %160 = sbr.rel (0) target = $region17
    $region16: #{tpu_custom_call.1} parent=1 // pred_region
      %161 = dma.done [#allocation3], 256
    $region17: #{tpu_custom_call.1} parent=1 // pred_fallthru
      _
    %162 = vsyncpa [#allocation3], 1

</llo_original>
